<compile_context>
chip_gen: v7x
topology: tpu7x:2x2x1
jax: 0.10.0
libtpu: 0.0.40
codegen_flags: <defaults>
</compile_context>

<pallas_src>
import jax
import jax.numpy as jnp
from jax.experimental import pallas as pl
from jax.experimental.pallas import tpu as pltpu


# ----------------------------------------------------------------------------
# Sizes
# ----------------------------------------------------------------------------
N_KPT = 26                  # keypoints (26 x 2)
N_PARAM = 11                # PARSEC parameters
N_POINT = 257               # output airfoil points (257 x 2)
HIDDEN = 64

PARAM_PAD = 128             # lane-dense pad for the (B, 11) param output
POINT_PAD = 640             # lane-dense pad for the (B, 514) point output (5 x 128)


# ----------------------------------------------------------------------------
# Fused kernel:
#   h_a   = relu(sk@Wa1_sk + tk@Wa1_tk + sp@Wa1_sp + ba1)
#   param = h_a @ Wa2_pad + ba2_pad                      -> (B, 128)  [first 11 valid]
#   h_b   = relu(param@Wb1_param_pad + tk@Wb1_kpt + bb1)
#   point = h_b @ Wb2_pad + bb2_pad                      -> (B, 640)  [first 514 valid]
# ----------------------------------------------------------------------------
def _fused_kernel(sk_ref, tk_ref, sp_ref,
                  wa1_sk_ref, wa1_tk_ref, wa1_sp_ref, ba1_ref,
                  wa2_ref, ba2_ref,
                  wb1_p_ref, wb1_k_ref, bb1_ref,
                  wb2_ref, bb2_ref,
                  param_ref, point_ref):
    sk = sk_ref[...]                                                    # (B, 52)
    tk = tk_ref[...]                                                    # (B, 52)
    sp = sp_ref[...]                                                    # (B, 11)

    # ---- modelA (concat folded into three row-block matmuls) ----
    ha = jnp.dot(sk, wa1_sk_ref[...], preferred_element_type=jnp.float32)
    ha = ha + jnp.dot(tk, wa1_tk_ref[...], preferred_element_type=jnp.float32)
    ha = ha + jnp.dot(sp, wa1_sp_ref[...], preferred_element_type=jnp.float32)
    ha = jnp.maximum(ha + ba1_ref[...], 0.0)                            # (B, 64)

    param = jnp.dot(ha, wa2_ref[...], preferred_element_type=jnp.float32)
    param = param + ba2_ref[...]                                        # (B, 128)
    param_ref[...] = param.astype(param_ref.dtype)

    # ---- modelB.forward3 (expand + concat folded into the weights) ----
    hb = jnp.dot(param, wb1_p_ref[...], preferred_element_type=jnp.float32)
    hb = hb + jnp.dot(tk, wb1_k_ref[...], preferred_element_type=jnp.float32)
    hb = jnp.maximum(hb + bb1_ref[...], 0.0)                            # (B, 64)

    point = jnp.dot(hb, wb2_ref[...], preferred_element_type=jnp.float32)
    point = point + bb2_ref[...]                                        # (B, 640)
    point_ref[...] = point.astype(point_ref.dtype)


def _fused_forward_call(sk_flat, tk_flat, sp_flat, w):
    B = sk_flat.shape[0]
    vmem = pl.BlockSpec(memory_space=pltpu.MemorySpace.VMEM)
    n_in = 3 + len(w)
    return pl.pallas_call(
        _fused_kernel,
        out_shape=(jax.ShapeDtypeStruct((B, PARAM_PAD), jnp.float32),
                   jax.ShapeDtypeStruct((B, POINT_PAD), jnp.float32)),
        in_specs=[vmem] * n_in,
        out_specs=(vmem, vmem),
    )(sk_flat, tk_flat, sp_flat, *w)


# ----------------------------------------------------------------------------
# de_norm (used by editing_point in the original module; unused in forward)
# ----------------------------------------------------------------------------
def de_norm(data):
    mean = jnp.array([0.50194553, 0.01158151], dtype=data.dtype)
    std = jnp.array([0.35423523, 0.03827245], dtype=data.dtype)
    return (data + 1.0) / 2.0 * std + mean


# ----------------------------------------------------------------------------
# Deterministic synthetic parameters for modelA and modelB.forward3
# (same construction as before, in the original "unfolded" layout)
# ----------------------------------------------------------------------------
def init_params(key):
    def dense(key, fin, fout):
        kw, kb = jax.random.split(key)
        w = jax.random.normal(kw, (fin, fout), jnp.float32) * (1.0 / jnp.sqrt(fin))
        b = jax.random.normal(kb, (1, fout), jnp.float32) * 0.01
        return w, b

    ka1, ka2, kb1, kb2 = jax.random.split(key, 4)
    fa_in = N_KPT * 2 + N_KPT * 2 + N_PARAM          # 115
    fb_in = (N_PARAM + N_KPT) * 2                     # 74
    wa1, ba1 = dense(ka1, fa_in, HIDDEN)
    wa2, ba2 = dense(ka2, HIDDEN, N_PARAM)
    wb1, bb1 = dense(kb1, fb_in, HIDDEN)
    wb2, bb2 = dense(kb2, HIDDEN, N_POINT * 2)
    return dict(wa1=wa1, ba1=ba1, wa2=wa2, ba2=ba2,
                wb1=wb1, bb1=bb1, wb2=wb2, bb2=bb2)


# ----------------------------------------------------------------------------
# One-time weight preprocessing: split/fold/pad into the fused-kernel layout.
#   wa1 (115,64)  -> wa1_sk (52,64), wa1_tk (52,64), wa1_sp (11,64)
#   wa2 (64,11)   -> (64,128) zero-padded,  ba2 -> (1,128)
#   wb1 (74,64)   -> wb1_param (11,64) = rows[0:22].reshape(11,2,64).sum(1),
#                    padded to (128,64);   wb1_kpt = rows[22:74]  (52,64)
#   wb2 (64,514)  -> (64,640) zero-padded, bb2 -> (1,640)
# ----------------------------------------------------------------------------
def prep_params(p):
    wa1 = p["wa1"]
    wa1_sk = wa1[: N_KPT * 2]                                  # (52, 64)
    wa1_tk = wa1[N_KPT * 2: N_KPT * 4]                         # (52, 64)
    wa1_sp = wa1[N_KPT * 4:]                                   # (11, 64)

    wa2_p = jnp.zeros((HIDDEN, PARAM_PAD), jnp.float32).at[:, :N_PARAM].set(p["wa2"])
    ba2_p = jnp.zeros((1, PARAM_PAD), jnp.float32).at[:, :N_PARAM].set(p["ba2"])

    wb1 = p["wb1"]
    # condition flat layout: element 2i and 2i+1 both equal param_pred[i]
    # (expand(-1,-1,2)), so the two rows fold into their sum.
    wb1_param = wb1[: 2 * N_PARAM].reshape(N_PARAM, 2, HIDDEN).sum(axis=1)   # (11, 64)
    wb1_param_p = jnp.zeros((PARAM_PAD, HIDDEN), jnp.float32).at[:N_PARAM].set(wb1_param)
    wb1_kpt = wb1[2 * N_PARAM:]                                              # (52, 64)

    wb2_p = jnp.zeros((HIDDEN, POINT_PAD), jnp.float32).at[:, : N_POINT * 2].set(p["wb2"])
    bb2_p = jnp.zeros((1, POINT_PAD), jnp.float32).at[:, : N_POINT * 2].set(p["bb2"])

    return (wa1_sk, wa1_tk, wa1_sp, p["ba1"],
            wa2_p, ba2_p,
            wb1_param_p, wb1_kpt, p["bb1"],
            wb2_p, bb2_p)


# ----------------------------------------------------------------------------
# Diff_AB_Keypoint.forward (fused Pallas path)
# ----------------------------------------------------------------------------
def diff_ab_keypoint_forward(source_keypoint, target_keypoint, source_param, prep):
    B = source_keypoint.shape[0]
    sk_flat = source_keypoint.reshape(B, -1)       # (B, 52)
    tk_flat = target_keypoint.reshape(B, -1)       # (B, 52)
    sp_flat = source_param.reshape(B, -1)          # (B, 11)

    param_pad, point_pad = _fused_forward_call(sk_flat, tk_flat, sp_flat, prep)

    param_pred = param_pad[:, :N_PARAM]                                        # (B, 11)
    target_param_pred = jnp.broadcast_to(param_pred[:, :, None], (B, N_PARAM, 2))
    target_point_pred = point_pad[:, : N_POINT * 2].reshape(B, N_POINT, 2)
    return target_param_pred, target_point_pred


# ----------------------------------------------------------------------------
# Pure-JAX reference (uses the ORIGINAL unfolded weights) for correctness.
# ----------------------------------------------------------------------------
def _mlp2_ref(x, w1, b1, w2, b2):
    return jnp.maximum(x @ w1 + b1, 0.0) @ w2 + b2


def _forward_ref(source_keypoint, target_keypoint, source_param, p):
    B = source_keypoint.shape[0]
    xa = jnp.concatenate(
        [source_keypoint.reshape(B, -1),
         target_keypoint.reshape(B, -1),
         source_param.reshape(B, -1)], axis=-1)
    param_pred = _mlp2_ref(xa, p["wa1"], p["ba1"], p["wa2"], p["ba2"])
    target_param_pred = jnp.broadcast_to(param_pred[:, :, None], (B, N_PARAM, 2))
    condition = jnp.concatenate([target_param_pred, target_keypoint], axis=1)
    xb = condition.reshape(B, -1)
    point_flat = _mlp2_ref(xb, p["wb1"], p["bb1"], p["wb2"], p["bb2"])
    return target_param_pred, point_flat.reshape(B, N_POINT, 2)


if __name__ == "__main__":
    key = jax.random.PRNGKey(0)
    k_par, k_sk, k_tk, k_sp = jax.random.split(key, 4)

    params = init_params(k_par)
    prep = prep_params(params)        # one-time fold/pad of the weights

    B = 2
    source_keypoint = jax.random.normal(k_sk, (B, N_KPT, 2), jnp.float32)
    target_keypoint = jax.random.normal(k_tk, (B, N_KPT, 2), jnp.float32)
    source_param = jax.random.normal(k_sp, (B, N_PARAM, 1), jnp.float32)

    fwd = jax.jit(diff_ab_keypoint_forward)
    tpp, tptp = fwd(source_keypoint, target_keypoint, source_param, prep)
    jax.block_until_ready((tpp, tptp))

    # sanity check against pure-JAX reference using the original weights
    # (verifies the expand/concat -> weight-folding row ordering is correct)
    tpp_ref, tptp_ref = _forward_ref(source_keypoint, target_keypoint,
                                     source_param, params)
    assert tpp.shape == (B, N_PARAM, 2) and tptp.shape == (B, N_POINT, 2)
    assert jnp.allclose(tpp, tpp_ref, atol=1e-4, rtol=1e-4)
    assert jnp.allclose(tptp, tptp_ref, atol=1e-4, rtol=1e-4)

    # TODO(synk): editing_point / refine_forward need diffusion.sample_ddim,
    # vae.decode and Fit_airfoil (external numpy code) -- not translatable here.
    print("KERNEL_OK")
</pallas_src>

<mosaic_0001>
module attributes {stable_mosaic.version = 11 : i64} {
  func.func @_fused_kernel(%arg0: memref<2x52xf32, #tpu.memory_space<vmem>>, %arg1: memref<2x52xf32, #tpu.memory_space<vmem>>, %arg2: memref<2x11xf32, #tpu.memory_space<vmem>>, %arg3: memref<52x64xf32, #tpu.memory_space<vmem>>, %arg4: memref<52x64xf32, #tpu.memory_space<vmem>>, %arg5: memref<11x64xf32, #tpu.memory_space<vmem>>, %arg6: memref<1x64xf32, #tpu.memory_space<vmem>>, %arg7: memref<64x128xf32, #tpu.memory_space<vmem>>, %arg8: memref<1x128xf32, #tpu.memory_space<vmem>>, %arg9: memref<128x64xf32, #tpu.memory_space<vmem>>, %arg10: memref<52x64xf32, #tpu.memory_space<vmem>>, %arg11: memref<1x64xf32, #tpu.memory_space<vmem>>, %arg12: memref<64x640xf32, #tpu.memory_space<vmem>>, %arg13: memref<1x640xf32, #tpu.memory_space<vmem>>, %arg14: memref<2x128xf32, #tpu.memory_space<vmem>>, %arg15: memref<2x640xf32, #tpu.memory_space<vmem>>) attributes {dimension_semantics = [], scalar_prefetch = 0 : i64, scratch_operands = 0 : i64, tpu.core_type = #tpu.core_type<tc>} {
    %c0 = arith.constant 0 : index
    %c0_0 = arith.constant 0 : index
    %0 = vector.load %arg0[%c0, %c0_0] : memref<2x52xf32, #tpu.memory_space<vmem>>, vector<2x52xf32>
    %c0_1 = arith.constant 0 : index
    %c0_2 = arith.constant 0 : index
    %1 = vector.load %arg1[%c0_1, %c0_2] : memref<2x52xf32, #tpu.memory_space<vmem>>, vector<2x52xf32>
    %c0_3 = arith.constant 0 : index
    %c0_4 = arith.constant 0 : index
    %2 = vector.load %arg2[%c0_3, %c0_4] : memref<2x11xf32, #tpu.memory_space<vmem>>, vector<2x11xf32>
    %c0_5 = arith.constant 0 : index
    %c0_6 = arith.constant 0 : index
    %3 = vector.load %arg3[%c0_5, %c0_6] : memref<52x64xf32, #tpu.memory_space<vmem>>, vector<52x64xf32>
    %cst = arith.constant dense<0.000000e+00> : vector<2x64xf32>
    %4 = tpu.matmul %0, %3, %cst {dimension_numbers = #tpu.dot_dimension_numbers<[1], [0], [0], [1], [0, 0, 1, 1], [], []>} : vector<2x52xf32>, vector<52x64xf32>, vector<2x64xf32> -> vector<2x64xf32>
    %c0_7 = arith.constant 0 : index
    %c0_8 = arith.constant 0 : index
    %5 = vector.load %arg4[%c0_7, %c0_8] : memref<52x64xf32, #tpu.memory_space<vmem>>, vector<52x64xf32>
    %cst_9 = arith.constant dense<0.000000e+00> : vector<2x64xf32>
    %6 = tpu.matmul %1, %5, %cst_9 {dimension_numbers = #tpu.dot_dimension_numbers<[1], [0], [0], [1], [0, 0, 1, 1], [], []>} : vector<2x52xf32>, vector<52x64xf32>, vector<2x64xf32> -> vector<2x64xf32>
    %7 = arith.addf %4, %6 : vector<2x64xf32>
    %c0_10 = arith.constant 0 : index
    %c0_11 = arith.constant 0 : index
    %8 = vector.load %arg5[%c0_10, %c0_11] : memref<11x64xf32, #tpu.memory_space<vmem>>, vector<11x64xf32>
    %cst_12 = arith.constant dense<0.000000e+00> : vector<2x64xf32>
    %9 = tpu.matmul %2, %8, %cst_12 {dimension_numbers = #tpu.dot_dimension_numbers<[1], [0], [0], [1], [0, 0, 1, 1], [], []>} : vector<2x11xf32>, vector<11x64xf32>, vector<2x64xf32> -> vector<2x64xf32>
    %10 = arith.addf %7, %9 : vector<2x64xf32>
    %c0_13 = arith.constant 0 : index
    %c0_14 = arith.constant 0 : index
    %11 = vector.load %arg6[%c0_13, %c0_14] : memref<1x64xf32, #tpu.memory_space<vmem>>, vector<1x64xf32>
    %12 = vector.broadcast %11 : vector<1x64xf32> to vector<2x64xf32>
    %13 = arith.addf %10, %12 : vector<2x64xf32>
    %cst_15 = arith.constant 0.000000e+00 : f32
    %14 = vector.broadcast %cst_15 : f32 to vector<2x64xf32>
    %15 = arith.maximumf %13, %14 : vector<2x64xf32>
    %c0_16 = arith.constant 0 : index
    %c0_17 = arith.constant 0 : index
    %16 = vector.load %arg7[%c0_16, %c0_17] : memref<64x128xf32, #tpu.memory_space<vmem>>, vector<64x128xf32>
    %cst_18 = arith.constant dense<0.000000e+00> : vector<2x128xf32>
    %17 = tpu.matmul %15, %16, %cst_18 {dimension_numbers = #tpu.dot_dimension_numbers<[1], [0], [0], [1], [0, 0, 1, 1], [], []>} : vector<2x64xf32>, vector<64x128xf32>, vector<2x128xf32> -> vector<2x128xf32>
    %c0_19 = arith.constant 0 : index
    %c0_20 = arith.constant 0 : index
    %18 = vector.load %arg8[%c0_19, %c0_20] : memref<1x128xf32, #tpu.memory_space<vmem>>, vector<1x128xf32>
    %19 = vector.broadcast %18 : vector<1x128xf32> to vector<2x128xf32>
    %20 = arith.addf %17, %19 : vector<2x128xf32>
    %c0_21 = arith.constant 0 : index
    %c0_22 = arith.constant 0 : index
    %21 = vector.load %arg14[%c0_21, %c0_22] : memref<2x128xf32, #tpu.memory_space<vmem>>, vector<2x128xf32>
    tpu.vector_store %arg14[%c0_21, %c0_22], %20 {strides = array<i32>} : memref<2x128xf32, #tpu.memory_space<vmem>>, vector<2x128xf32>,
    %c0_23 = arith.constant 0 : index
    %c0_24 = arith.constant 0 : index
    %22 = vector.load %arg9[%c0_23, %c0_24] : memref<128x64xf32, #tpu.memory_space<vmem>>, vector<128x64xf32>
    %cst_25 = arith.constant dense<0.000000e+00> : vector<2x64xf32>
    %23 = tpu.matmul %20, %22, %cst_25 {dimension_numbers = #tpu.dot_dimension_numbers<[1], [0], [0], [1], [0, 0, 1, 1], [], []>} : vector<2x128xf32>, vector<128x64xf32>, vector<2x64xf32> -> vector<2x64xf32>
    %c0_26 = arith.constant 0 : index
    %c0_27 = arith.constant 0 : index
    %24 = vector.load %arg10[%c0_26, %c0_27] : memref<52x64xf32, #tpu.memory_space<vmem>>, vector<52x64xf32>
    %cst_28 = arith.constant dense<0.000000e+00> : vector<2x64xf32>
    %25 = tpu.matmul %1, %24, %cst_28 {dimension_numbers = #tpu.dot_dimension_numbers<[1], [0], [0], [1], [0, 0, 1, 1], [], []>} : vector<2x52xf32>, vector<52x64xf32>, vector<2x64xf32> -> vector<2x64xf32>
    %26 = arith.addf %23, %25 : vector<2x64xf32>
    %c0_29 = arith.constant 0 : index
    %c0_30 = arith.constant 0 : index
    %27 = vector.load %arg11[%c0_29, %c0_30] : memref<1x64xf32, #tpu.memory_space<vmem>>, vector<1x64xf32>
    %28 = vector.broadcast %27 : vector<1x64xf32> to vector<2x64xf32>
    %29 = arith.addf %26, %28 : vector<2x64xf32>
    %cst_31 = arith.constant 0.000000e+00 : f32
    %30 = vector.broadcast %cst_31 : f32 to vector<2x64xf32>
    %31 = arith.maximumf %29, %30 : vector<2x64xf32>
    %c0_32 = arith.constant 0 : index
    %c0_33 = arith.constant 0 : index
    %32 = vector.load %arg12[%c0_32, %c0_33] : memref<64x640xf32, #tpu.memory_space<vmem>>, vector<64x640xf32>
    %cst_34 = arith.constant dense<0.000000e+00> : vector<2x640xf32>
    %33 = tpu.matmul %31, %32, %cst_34 {dimension_numbers = #tpu.dot_dimension_numbers<[1], [0], [0], [1], [0, 0, 1, 1], [], []>} : vector<2x64xf32>, vector<64x640xf32>, vector<2x640xf32> -> vector<2x640xf32>
    %c0_35 = arith.constant 0 : index
    %c0_36 = arith.constant 0 : index
    %34 = vector.load %arg13[%c0_35, %c0_36] : memref<1x640xf32, #tpu.memory_space<vmem>>, vector<1x640xf32>
    %35 = vector.broadcast %34 : vector<1x640xf32> to vector<2x640xf32>
    %36 = arith.addf %33, %35 : vector<2x640xf32>
    %c0_37 = arith.constant 0 : index
    %c0_38 = arith.constant 0 : index
    %37 = vector.load %arg15[%c0_37, %c0_38] : memref<2x640xf32, #tpu.memory_space<vmem>>, vector<2x640xf32>
    tpu.vector_store %arg15[%c0_37, %c0_38], %36 {strides = array<i32>} : memref<2x640xf32, #tpu.memory_space<vmem>>, vector<2x640xf32>,
    return
  }
}

</mosaic_0001>

<llo_original>
// kernel: diff_ab_keypoint_forward.1
$region0: #{diff_ab_keypoint_forward.1}
  #allocation0 [shape = 'u32[]', space=smem, size = 0x4, offset = 0x4, fixed_abs, tag = 'smem constant byte address 0x4 - core index']
  #allocation1 [shape = 'u32[144,128]{1,0:T(1,128)}', space=vmem, size = 0x12000, scoped, tag = 'internal scratch']
  %s0 = inlined_call_operand.vmem [shape: f32[2,52], index: 0, kind: input, shape index: {}]
  %s1 = inlined_call_operand.vmem [shape: f32[2,52], index: 1, kind: input, shape index: {}]
  %s2 = inlined_call_operand.vmem [shape: f32[2,11], index: 2, kind: input, shape index: {}]
  %s3 = inlined_call_operand.vmem [shape: f32[52,64], index: 3, kind: input, shape index: {}]
  %s4 = inlined_call_operand.hbm [shape: f32[52,64], index: 4, kind: input, shape index: {}]
  %s5 = inlined_call_operand.vmem [shape: f32[11,64], index: 5, kind: input, shape index: {}]
  %s6 = inlined_call_operand.vmem [shape: f32[1,64], index: 6, kind: input, shape index: {}]
  %s7 = inlined_call_operand.vmem [shape: f32[64,128], index: 7, kind: input, shape index: {}]
  %s8 = inlined_call_operand.hbm [shape: f32[1,128], index: 8, kind: input, shape index: {}]
  %s9 = inlined_call_operand.vmem [shape: f32[128,64], index: 9, kind: input, shape index: {}]
  %s10 = inlined_call_operand.hbm [shape: f32[52,64], index: 10, kind: input, shape index: {}]
  %s11 = inlined_call_operand.hbm [shape: f32[1,64], index: 11, kind: input, shape index: {}]
  %s12 = inlined_call_operand.vmem [shape: f32[64,640], index: 12, kind: input, shape index: {}]
  %s13 = inlined_call_operand.vmem [shape: f32[1,640], index: 13, kind: input, shape index: {}]
  %s14 = inlined_call_operand.vmem [shape: f32[2,128], index: 14, kind: output, shape index: {0}]
  %s15 = inlined_call_operand.vmem [shape: f32[2,640], index: 15, kind: output, shape index: {1}]
  %16 = xla_tuple %s14, %s15
  %s17 = sld [smem:[#allocation0]]
  $region90: #{diff_ab_keypoint_forward.1} parent=0
    _
  %s19 = ssub.s32 1, %s17
  %s20 = scalar_select 0, %s19, %s17
  $region1: #{diff_ab_keypoint_forward.1} parent=0
    #allocation2 [shape = 'u8[28672]{0}', space=vmem, size = 0x7000, scoped, tag = 'input window, operand 4, single buffered']
    #allocation3 [shape = 's32[1]{0}', space=sflag, size = 0x4, scoped, tag = 'scoped memory for diff_ab_keypoint_forward.1']
    #allocation4 [shape = 'u8[512]{0}', space=vmem, size = 0x400, scoped, tag = 'input window, operand 8, single buffered']
    #allocation5 [shape = 's32[1]{0}', space=sflag, size = 0x4, scoped, tag = 'scoped memory for diff_ab_keypoint_forward.1']
    #allocation6 [shape = 'u8[28672]{0}', space=vmem, size = 0x7000, scoped, tag = 'input window, operand 10, single buffered']
    #allocation7 [shape = 'u8[512]{0}', space=vmem, size = 0x400, scoped, tag = 'input window, operand 11, single buffered']
    #allocation8 [shape = 's32[1]{0}', space=sflag, size = 0x4, scoped, tag = 'scoped memory for diff_ab_keypoint_forward.1']
    %21 = vsyncpa [#allocation3], 0
    %22 = vsyncpa [#allocation5], 0
    %23 = vsyncpa [#allocation8], 0
    // Predicated region
    $region2: #{diff_ab_keypoint_forward.1} parent=1 // pred_check
      _
    $region3: #{diff_ab_keypoint_forward.1} parent=1 // pred_check_branch
      %25 = sbr.rel (0) target = $region5
    $region4: #{diff_ab_keypoint_forward.1} parent=1 // pred_region
      _
    $region5: #{diff_ab_keypoint_forward.1} parent=1 // pred_fallthru
      _
    // Predicated region
    $region6: #{diff_ab_keypoint_forward.1} parent=1 // pred_check
      _
    $region7: #{diff_ab_keypoint_forward.1} parent=1 // pred_check_branch
      %27 = sbr.rel (0) target = $region9
    $region8: #{diff_ab_keypoint_forward.1} parent=1 // pred_region
      _
    $region9: #{diff_ab_keypoint_forward.1} parent=1 // pred_fallthru
      _
    // Predicated region
    $region10: #{diff_ab_keypoint_forward.1} parent=1 // pred_check
      _
    $region11: #{diff_ab_keypoint_forward.1} parent=1 // pred_check_branch
      %29 = sbr.rel (0) target = $region13
    $region12: #{diff_ab_keypoint_forward.1} parent=1 // pred_region
      _
    $region13: #{diff_ab_keypoint_forward.1} parent=1 // pred_fallthru
      _
    // Predicated region
    $region14: #{diff_ab_keypoint_forward.1} parent=1 // pred_check
      _
    $region15: #{diff_ab_keypoint_forward.1} parent=1 // pred_check_branch
      %31 = sbr.rel (0) target = $region17
    $region16: #{diff_ab_keypoint_forward.1} parent=1 // pred_region
      _
    $region17: #{diff_ab_keypoint_forward.1} parent=1 // pred_fallthru
      _
    // Predicated region
    $region18: #{diff_ab_keypoint_forward.1} parent=1 // pred_check
      _
    $region19: #{diff_ab_keypoint_forward.1} parent=1 // pred_check_branch
      %33 = sbr.rel (0) target = $region21
    $region20: #{diff_ab_keypoint_forward.1} parent=1 // pred_region
      %s35 = ssub.s32 896, 896
      %36 = vsyncadd [#allocation3], %s35
      %s37 = sshll.u32 [#allocation2], 4
      %s38 = int_to_ptr.vmem [resolvable:$true] %s37
      %43 = dma.hbm_to_vmem [thread:$0]  %s4, 896, %s38, [#allocation3], 128, 128, 8
    $region21: #{diff_ab_keypoint_forward.1} parent=1 // pred_fallthru
      _
    // Predicated region
    $region22: #{diff_ab_keypoint_forward.1} parent=1 // pred_check
      _
    $region23: #{diff_ab_keypoint_forward.1} parent=1 // pred_check_branch
      %45 = sbr.rel (0) target = $region25
    $region24: #{diff_ab_keypoint_forward.1} parent=1 // pred_region
      _
    $region25: #{diff_ab_keypoint_forward.1} parent=1 // pred_fallthru
      _
    // Predicated region
    $region26: #{diff_ab_keypoint_forward.1} parent=1 // pred_check
      _
    $region27: #{diff_ab_keypoint_forward.1} parent=1 // pred_check_branch
      %47 = sbr.rel (0) target = $region29
    $region28: #{diff_ab_keypoint_forward.1} parent=1 // pred_region
      _
    $region29: #{diff_ab_keypoint_forward.1} parent=1 // pred_fallthru
      _
    // Predicated region
    $region30: #{diff_ab_keypoint_forward.1} parent=1 // pred_check
      _
    $region31: #{diff_ab_keypoint_forward.1} parent=1 // pred_check_branch
      %49 = sbr.rel (0) target = $region33
    $region32: #{diff_ab_keypoint_forward.1} parent=1 // pred_region
      _
    $region33: #{diff_ab_keypoint_forward.1} parent=1 // pred_fallthru
      _
    // Predicated region
    $region34: #{diff_ab_keypoint_forward.1} parent=1 // pred_check
      _
    $region35: #{diff_ab_keypoint_forward.1} parent=1 // pred_check_branch
      %51 = sbr.rel (0) target = $region37
    $region36: #{diff_ab_keypoint_forward.1} parent=1 // pred_region
      %s53 = ssub.s32 16, 16
      %54 = vsyncadd [#allocation5], %s53
      %s56 = sshll.u32 [#allocation4], 4
      %s57 = int_to_ptr.vmem [resolvable:$true] %s56
      %59 = dma.hbm_to_vmem [thread:$0]  %s8, 16, %s57, [#allocation5]
    $region37: #{diff_ab_keypoint_forward.1} parent=1 // pred_fallthru
      _
    // Predicated region
    $region38: #{diff_ab_keypoint_forward.1} parent=1 // pred_check
      _
    $region39: #{diff_ab_keypoint_forward.1} parent=1 // pred_check_branch
      %61 = sbr.rel (0) target = $region41
    $region40: #{diff_ab_keypoint_forward.1} parent=1 // pred_region
      _
    $region41: #{diff_ab_keypoint_forward.1} parent=1 // pred_fallthru
      _
    // Predicated region
    $region42: #{diff_ab_keypoint_forward.1} parent=1 // pred_check
      _
    $region43: #{diff_ab_keypoint_forward.1} parent=1 // pred_check_branch
      %63 = sbr.rel (0) target = $region45
    $region44: #{diff_ab_keypoint_forward.1} parent=1 // pred_region
      %s65 = ssub.s32 896, 896
      %66 = vsyncadd [#allocation5], %s65
      %s67 = sshll.u32 [#allocation6], 4
      %s68 = int_to_ptr.vmem [resolvable:$true] %s67
      %73 = dma.hbm_to_vmem [thread:$0]  %s10, 896, %s68, [#allocation5], 128, 128, 8
    $region45: #{diff_ab_keypoint_forward.1} parent=1 // pred_fallthru
      _
    // Predicated region
    $region46: #{diff_ab_keypoint_forward.1} parent=1 // pred_check
      _
    $region47: #{diff_ab_keypoint_forward.1} parent=1 // pred_check_branch
      %75 = sbr.rel (0) target = $region49
    $region48: #{diff_ab_keypoint_forward.1} parent=1 // pred_region
      %s77 = ssub.s32 16, 16
      %78 = vsyncadd [#allocation8], %s77
      %s80 = sshll.u32 [#allocation7], 4
      %s81 = int_to_ptr.vmem [resolvable:$true] %s80
      %83 = dma.hbm_to_vmem [thread:$0]  %s11, 16, %s81, [#allocation8]
    $region49: #{diff_ab_keypoint_forward.1} parent=1 // pred_fallthru
      _
    // Predicated region
    $region50: #{diff_ab_keypoint_forward.1} parent=1 // pred_check
      _
    $region51: #{diff_ab_keypoint_forward.1} parent=1 // pred_check_branch
      %85 = sbr.rel (0) target = $region53
    $region52: #{diff_ab_keypoint_forward.1} parent=1 // pred_region
      _
    $region53: #{diff_ab_keypoint_forward.1} parent=1 // pred_fallthru
      _
    // Predicated region
    $region54: #{diff_ab_keypoint_forward.1} parent=1 // pred_check
      _
    $region55: #{diff_ab_keypoint_forward.1} parent=1 // pred_check_branch
      %87 = sbr.rel (0) target = $region57
    $region56: #{diff_ab_keypoint_forward.1} parent=1 // pred_region
      _
    $region57: #{diff_ab_keypoint_forward.1} parent=1 // pred_fallthru
      _
    // Predicated region
    $region58: #{diff_ab_keypoint_forward.1} parent=1 // pred_check
      _
    $region59: #{diff_ab_keypoint_forward.1} parent=1 // pred_check_branch
      %89 = sbr.rel (0) target = $region61
    $region60: #{diff_ab_keypoint_forward.1} parent=1 // pred_region
      %90 = dma.done [#allocation3], 896
    $region61: #{diff_ab_keypoint_forward.1} parent=1 // pred_fallthru
      _
    // Predicated region
    $region62: #{diff_ab_keypoint_forward.1} parent=1 // pred_check
      _
    $region63: #{diff_ab_keypoint_forward.1} parent=1 // pred_check_branch
      %92 = sbr.rel (0) target = $region65
    $region64: #{diff_ab_keypoint_forward.1} parent=1 // pred_region
      %93 = dma.done [#allocation5], 16
    $region65: #{diff_ab_keypoint_forward.1} parent=1 // pred_fallthru
      _
    // Predicated region
    $region66: #{diff_ab_keypoint_forward.1} parent=1 // pred_check
      _
    $region67: #{diff_ab_keypoint_forward.1} parent=1 // pred_check_branch
      %95 = sbr.rel (0) target = $region69
    $region68: #{diff_ab_keypoint_forward.1} parent=1 // pred_region
      %96 = dma.done [#allocation5], 896
    $region69: #{diff_ab_keypoint_forward.1} parent=1 // pred_fallthru
      _
    // Predicated region
    $region70: #{diff_ab_keypoint_forward.1} parent=1 // pred_check
      _
    $region71: #{diff_ab_keypoint_forward.1} parent=1 // pred_check_branch
      %98 = sbr.rel (0) target = $region73
    $region72: #{diff_ab_keypoint_forward.1} parent=1 // pred_region
      %99 = dma.done [#allocation8], 16
    $region73: #{diff_ab_keypoint_forward.1} parent=1 // pred_fallthru
      _
    %v100 = vld [vmem:[%s0] sm:$0x3]
    %v101 = vld [vmem:[%s1] sm:$0x3]
    %v102 = vld [vmem:[%s2] sm:$0x3]
    %v103 = vld [vmem:[%s3] sm:$0xff]
    %v104 = vld [vmem:[%s3 + $0x8] sm:$0xff]
    %v105 = vld [vmem:[%s3 + $0x10] sm:$0xff]
    %v106 = vld [vmem:[%s3 + $0x18] sm:$0xff]
    %v107 = vld [vmem:[%s3 + $0x20] sm:$0xff]
    %v108 = vld [vmem:[%s3 + $0x28] sm:$0xff]
    %v109 = vld [vmem:[%s3 + $0x30] sm:$0xf]
    %v110 = vld [vmem:[#allocation2] sm:$0xff]
    %v111 = vld [vmem:[#allocation2 + $0x8] sm:$0xff]
    %v112 = vld [vmem:[#allocation2 + $0x10] sm:$0xff]
    %v113 = vld [vmem:[#allocation2 + $0x18] sm:$0xff]
    %v114 = vld [vmem:[#allocation2 + $0x20] sm:$0xff]
    %v115 = vld [vmem:[#allocation2 + $0x28] sm:$0xff]
    %v116 = vld [vmem:[#allocation2 + $0x30] sm:$0xf]
    %vm117 = vcmask 424960
    %v119 = vsel %vm117, %v101, 0
    %vm121 = vcmask 1043456
    %v123 = vsel %vm121, %v116, 0
    %125 = vmatprep.subr.mxu0 0.0
    %126 = vmatpush1.msra.mxu0 %v110
    %127 = vmatprep.subr.mxu0 0.0
    %128 = vmatpush1.msra.mxu0 %v111
    %129 = vmatprep.subr.mxu0 0.0
    %130 = vmatpush1.msra.mxu0 %v112
    %131 = vmatprep.subr.mxu0 0.0
    %132 = vmatpush1.msra.mxu0 %v113
    %133 = vmatprep.subr.mxu0 0.0
    %134 = vmatpush1.msra.mxu0 %v114
    %135 = vmatprep.subr.mxu0 0.0
    %136 = vmatpush1.msra.mxu0 %v115
    %137 = vmatprep.subr.mxu0 0.0
    %138 = vmatpush1.msra.mxu0 %v123
    %139 = vmatprep.subr.mxu0 0.0
    %140 = vmatpush1.msra.mxu0 0.0
    %141 = vmatprep.subr.mxu0 0.0
    %142 = vmatpush1.msra.mxu0 0.0
    %143 = vmatprep.subr.mxu0 0.0
    %144 = vmatpush1.msra.mxu0 0.0
    %145 = vmatprep.subr.mxu0 0.0
    %146 = vmatpush1.msra.mxu0 0.0
    %147 = vmatprep.subr.mxu0 0.0
    %148 = vmatpush1.msra.mxu0 0.0
    %149 = vmatprep.subr.mxu0 0.0
    %150 = vmatpush1.msra.mxu0 0.0
    %151 = vmatprep.subr.mxu0 0.0
    %152 = vmatpush1.msra.mxu0 0.0
    %153 = vmatprep.subr.mxu0 0.0
    %154 = vmatpush1.msra.mxu0 0.0
    %155 = vmatprep.subr.mxu0 0.0
    %156 = vmatpush1.msra.mxu0 0.0
    %157 = vmatprep.subr.mxu0 0.0
    %158 = vmatpush1.msra.mxu0 0.0
    %159 = vmatprep.subr.mxu0 0.0
    %160 = vmatpush1.msra.mxu0 0.0
    %161 = vmatprep.subr.mxu0 0.0
    %162 = vmatpush1.msra.mxu0 0.0
    %163 = vmatprep.subr.mxu0 0.0
    %164 = vmatpush1.msra.mxu0 0.0
    %165 = vmatprep.subr.mxu0 0.0
    %166 = vmatpush1.msra.mxu0 0.0
    %167 = vmatprep.subr.mxu0 0.0
    %168 = vmatpush1.msra.mxu0 0.0
    %169 = vmatprep.subr.mxu0 0.0
    %170 = vmatpush1.msra.mxu0 0.0
    %171 = vmatprep.subr.mxu0 0.0
    %172 = vmatpush1.msra.mxu0 0.0
    %173 = vmatprep.subr.mxu0 0.0
    %174 = vmatpush1.msra.mxu0 0.0
    %175 = vmatprep.subr.mxu0 0.0
    %176 = vmatpush1.msra.mxu0 0.0
    %177 = vmatprep.subr.mxu0 0.0
    %178 = vmatpush1.msra.mxu0 0.0
    %179 = vmatprep.subr.mxu0 0.0
    %180 = vmatpush1.msra.mxu0 0.0
    %181 = vmatprep.subr.mxu0 0.0
    %182 = vmatpush1.msra.mxu0 0.0
    %183 = vmatprep.subr.mxu0 0.0
    %184 = vmatpush1.msra.mxu0 0.0
    %185 = vmatprep.subr.mxu0 0.0
    %186 = vmatpush1.msra.mxu0 0.0
    %187 = vmatprep.subr.mxu0 0.0
    %188 = vmatpush1.msra.mxu0 0.0
    %189 = vmatprep.mubr.f32.mxu0 0.0
    %190 = vmatmul.mubr.f32.gmra.mrb[0].mxu0 %v119
    %v191 = vpop.f32.mrb[0].mxu0
    %v192 = vadd.f32 0.0, %v191
    %v193 = vpop.f32.mrb[0].mxu0
    %194 = vdwg.mxu0
    %v196 = vsel %vm117, %v100, 0
    %v199 = vsel %vm121, %v109, 0
    %201 = vmatprep.subr.mxu0 0.0
    %202 = vmatpush1.msra.mxu0 %v103
    %203 = vmatprep.subr.mxu0 0.0
    %204 = vmatpush1.msra.mxu0 %v104
    %205 = vmatprep.subr.mxu0 0.0
    %206 = vmatpush1.msra.mxu0 %v105
    %207 = vmatprep.subr.mxu0 0.0
    %208 = vmatpush1.msra.mxu0 %v106
    %209 = vmatprep.subr.mxu0 0.0
    %210 = vmatpush1.msra.mxu0 %v107
    %211 = vmatprep.subr.mxu0 0.0
    %212 = vmatpush1.msra.mxu0 %v108
    %213 = vmatprep.subr.mxu0 0.0
    %214 = vmatpush1.msra.mxu0 %v199
    %215 = vmatprep.subr.mxu0 0.0
    %216 = vmatpush1.msra.mxu0 0.0
    %217 = vmatprep.subr.mxu0 0.0
    %218 = vmatpush1.msra.mxu0 0.0
    %219 = vmatprep.subr.mxu0 0.0
    %220 = vmatpush1.msra.mxu0 0.0
    %221 = vmatprep.subr.mxu0 0.0
    %222 = vmatpush1.msra.mxu0 0.0
    %223 = vmatprep.subr.mxu0 0.0
    %224 = vmatpush1.msra.mxu0 0.0
    %225 = vmatprep.subr.mxu0 0.0
    %226 = vmatpush1.msra.mxu0 0.0
    %227 = vmatprep.subr.mxu0 0.0
    %228 = vmatpush1.msra.mxu0 0.0
    %229 = vmatprep.subr.mxu0 0.0
    %230 = vmatpush1.msra.mxu0 0.0
    %231 = vmatprep.subr.mxu0 0.0
    %232 = vmatpush1.msra.mxu0 0.0
    %233 = vmatprep.subr.mxu0 0.0
    %234 = vmatpush1.msra.mxu0 0.0
    %235 = vmatprep.subr.mxu0 0.0
    %236 = vmatpush1.msra.mxu0 0.0
    %237 = vmatprep.subr.mxu0 0.0
    %238 = vmatpush1.msra.mxu0 0.0
    %239 = vmatprep.subr.mxu0 0.0
    %240 = vmatpush1.msra.mxu0 0.0
    %241 = vmatprep.subr.mxu0 0.0
    %242 = vmatpush1.msra.mxu0 0.0
    %243 = vmatprep.subr.mxu0 0.0
    %244 = vmatpush1.msra.mxu0 0.0
    %245 = vmatprep.subr.mxu0 0.0
    %246 = vmatpush1.msra.mxu0 0.0
    %247 = vmatprep.subr.mxu0 0.0
    %248 = vmatpush1.msra.mxu0 0.0
    %249 = vmatprep.subr.mxu0 0.0
    %250 = vmatpush1.msra.mxu0 0.0
    %251 = vmatprep.subr.mxu0 0.0
    %252 = vmatpush1.msra.mxu0 0.0
    %253 = vmatprep.subr.mxu0 0.0
    %254 = vmatpush1.msra.mxu0 0.0
    %255 = vmatprep.subr.mxu0 0.0
    %256 = vmatpush1.msra.mxu0 0.0
    %257 = vmatprep.subr.mxu0 0.0
    %258 = vmatpush1.msra.mxu0 0.0
    %259 = vmatprep.subr.mxu0 0.0
    %260 = vmatpush1.msra.mxu0 0.0
    %261 = vmatprep.subr.mxu0 0.0
    %262 = vmatpush1.msra.mxu0 0.0
    %263 = vmatprep.subr.mxu0 0.0
    %264 = vmatpush1.msra.mxu0 0.0
    %265 = vmatprep.mubr.f32.mxu0 0.0
    %266 = vmatmul.mubr.f32.gmra.mrb[0].mxu0 %v196
    %v267 = vpop.f32.mrb[0].mxu0
    %v268 = vadd.f32 %v192, %v267
    %v269 = vpop.f32.mrb[0].mxu0
    %270 = vdwg.mxu0
    %v271 = vld [vmem:[%s5] sm:$0xff]
    %v272 = vld [vmem:[%s5 + $0x8] sm:$0x7]
    %vm273 = vcmask 89088
    %v275 = vsel %vm273, %v102, 0
    %vm277 = vcmask 1042432
    %v279 = vsel %vm277, %v272, 0
    %281 = vmatprep.subr.mxu0 0.0
    %282 = vmatpush1.msra.mxu0 %v271
    %283 = vmatprep.subr.mxu0 0.0
    %284 = vmatpush1.msra.mxu0 %v279
    %285 = vmatprep.subr.mxu0 0.0
    %286 = vmatpush1.msra.mxu0 0.0
    %287 = vmatprep.subr.mxu0 0.0
    %288 = vmatpush1.msra.mxu0 0.0
    %289 = vmatprep.subr.mxu0 0.0
    %290 = vmatpush1.msra.mxu0 0.0
    %291 = vmatprep.subr.mxu0 0.0
    %292 = vmatpush1.msra.mxu0 0.0
    %293 = vmatprep.subr.mxu0 0.0
    %294 = vmatpush1.msra.mxu0 0.0
    %295 = vmatprep.subr.mxu0 0.0
    %296 = vmatpush1.msra.mxu0 0.0
    %297 = vmatprep.subr.mxu0 0.0
    %298 = vmatpush1.msra.mxu0 0.0
    %299 = vmatprep.subr.mxu0 0.0
    %300 = vmatpush1.msra.mxu0 0.0
    %301 = vmatprep.subr.mxu0 0.0
    %302 = vmatpush1.msra.mxu0 0.0
    %303 = vmatprep.subr.mxu0 0.0
    %304 = vmatpush1.msra.mxu0 0.0
    %305 = vmatprep.subr.mxu0 0.0
    %306 = vmatpush1.msra.mxu0 0.0
    %307 = vmatprep.subr.mxu0 0.0
    %308 = vmatpush1.msra.mxu0 0.0
    %309 = vmatprep.subr.mxu0 0.0
    %310 = vmatpush1.msra.mxu0 0.0
    %311 = vmatprep.subr.mxu0 0.0
    %312 = vmatpush1.msra.mxu0 0.0
    %313 = vmatprep.subr.mxu0 0.0
    %314 = vmatpush1.msra.mxu0 0.0
    %315 = vmatprep.subr.mxu0 0.0
    %316 = vmatpush1.msra.mxu0 0.0
    %317 = vmatprep.subr.mxu0 0.0
    %318 = vmatpush1.msra.mxu0 0.0
    %319 = vmatprep.subr.mxu0 0.0
    %320 = vmatpush1.msra.mxu0 0.0
    %321 = vmatprep.subr.mxu0 0.0
    %322 = vmatpush1.msra.mxu0 0.0
    %323 = vmatprep.subr.mxu0 0.0
    %324 = vmatpush1.msra.mxu0 0.0
    %325 = vmatprep.subr.mxu0 0.0
    %326 = vmatpush1.msra.mxu0 0.0
    %327 = vmatprep.subr.mxu0 0.0
    %328 = vmatpush1.msra.mxu0 0.0
    %329 = vmatprep.subr.mxu0 0.0
    %330 = vmatpush1.msra.mxu0 0.0
    %331 = vmatprep.subr.mxu0 0.0
    %332 = vmatpush1.msra.mxu0 0.0
    %333 = vmatprep.subr.mxu0 0.0
    %334 = vmatpush1.msra.mxu0 0.0
    %335 = vmatprep.subr.mxu0 0.0
    %336 = vmatpush1.msra.mxu0 0.0
    %337 = vmatprep.subr.mxu0 0.0
    %338 = vmatpush1.msra.mxu0 0.0
    %339 = vmatprep.subr.mxu0 0.0
    %340 = vmatpush1.msra.mxu0 0.0
    %341 = vmatprep.subr.mxu0 0.0
    %342 = vmatpush1.msra.mxu0 0.0
    %343 = vmatprep.subr.mxu0 0.0
    %344 = vmatpush1.msra.mxu0 0.0
    %345 = vmatprep.mubr.f32.mxu0 0.0
    %346 = vmatmul.mubr.f32.gmra.mrb[0].mxu0 %v275
    %v347 = vpop.f32.mrb[0].mxu0
    %v348 = vadd.f32 0.0, %v347
    %v349 = vpop.f32.mrb[0].mxu0
    %350 = vdwg.mxu0
    %v351 = vadd.f32 %v268, %v348
    %v352 = vld [vmem:[%s6] sm:$0x1]
    %v354 = vlaneseq
    %v355 = vshrl.u32 %v354, 7
    %v356 = vsub.s32 0, %v355
    %v357 = vrot.slane %v352, %v356
    %v359 = vadd.f32 %v351, %v357
    %v360 = vmax.f32 %v359, 0.0
    %v361 = vld [vmem:[%s7] sm:$0xff]
    %v362 = vld [vmem:[%s7 + $0x8] sm:$0xff]
    %v363 = vld [vmem:[%s7 + $0x10] sm:$0xff]
    %v364 = vld [vmem:[%s7 + $0x18] sm:$0xff]
    %v365 = vld [vmem:[%s7 + $0x20] sm:$0xff]
    %v366 = vld [vmem:[%s7 + $0x28] sm:$0xff]
    %v367 = vld [vmem:[%s7 + $0x30] sm:$0xff]
    %v368 = vld [vmem:[%s7 + $0x38] sm:$0xff]
    %v369 = vld [vmem:[#allocation4] sm:$0x1]
    %v371 = vlaneseq
    %v372 = vshrl.u32 %v371, 7
    %v373 = vsub.s32 0, %v372
    %v374 = vrot.slane %v369, %v373
    %vm376 = vcmask 523264
    %v378 = vsel %vm376, %v360, 0
    %380 = vmatprep.subr.mxu0 0.0
    %381 = vmatpush1.msra.mxu0 %v361
    %382 = vmatprep.subr.mxu0 0.0
    %383 = vmatpush1.msra.mxu0 %v362
    %384 = vmatprep.subr.mxu0 0.0
    %385 = vmatpush1.msra.mxu0 %v363
    %386 = vmatprep.subr.mxu0 0.0
    %387 = vmatpush1.msra.mxu0 %v364
    %388 = vmatprep.subr.mxu0 0.0
    %389 = vmatpush1.msra.mxu0 %v365
    %390 = vmatprep.subr.mxu0 0.0
    %391 = vmatpush1.msra.mxu0 %v366
    %392 = vmatprep.subr.mxu0 0.0
    %393 = vmatpush1.msra.mxu0 %v367
    %394 = vmatprep.subr.mxu0 0.0
    %395 = vmatpush1.msra.mxu0 %v368
    %396 = vmatprep.subr.mxu0 0.0
    %397 = vmatpush1.msra.mxu0 0.0
    %398 = vmatprep.subr.mxu0 0.0
    %399 = vmatpush1.msra.mxu0 0.0
    %400 = vmatprep.subr.mxu0 0.0
    %401 = vmatpush1.msra.mxu0 0.0
    %402 = vmatprep.subr.mxu0 0.0
    %403 = vmatpush1.msra.mxu0 0.0
    %404 = vmatprep.subr.mxu0 0.0
    %405 = vmatpush1.msra.mxu0 0.0
    %406 = vmatprep.subr.mxu0 0.0
    %407 = vmatpush1.msra.mxu0 0.0
    %408 = vmatprep.subr.mxu0 0.0
    %409 = vmatpush1.msra.mxu0 0.0
    %410 = vmatprep.subr.mxu0 0.0
    %411 = vmatpush1.msra.mxu0 0.0
    %412 = vmatprep.subr.mxu0 0.0
    %413 = vmatpush1.msra.mxu0 0.0
    %414 = vmatprep.subr.mxu0 0.0
    %415 = vmatpush1.msra.mxu0 0.0
    %416 = vmatprep.subr.mxu0 0.0
    %417 = vmatpush1.msra.mxu0 0.0
    %418 = vmatprep.subr.mxu0 0.0
    %419 = vmatpush1.msra.mxu0 0.0
    %420 = vmatprep.subr.mxu0 0.0
    %421 = vmatpush1.msra.mxu0 0.0
    %422 = vmatprep.subr.mxu0 0.0
    %423 = vmatpush1.msra.mxu0 0.0
    %424 = vmatprep.subr.mxu0 0.0
    %425 = vmatpush1.msra.mxu0 0.0
    %426 = vmatprep.subr.mxu0 0.0
    %427 = vmatpush1.msra.mxu0 0.0
    %428 = vmatprep.subr.mxu0 0.0
    %429 = vmatpush1.msra.mxu0 0.0
    %430 = vmatprep.subr.mxu0 0.0
    %431 = vmatpush1.msra.mxu0 0.0
    %432 = vmatprep.subr.mxu0 0.0
    %433 = vmatpush1.msra.mxu0 0.0
    %434 = vmatprep.subr.mxu0 0.0
    %435 = vmatpush1.msra.mxu0 0.0
    %436 = vmatprep.subr.mxu0 0.0
    %437 = vmatpush1.msra.mxu0 0.0
    %438 = vmatprep.subr.mxu0 0.0
    %439 = vmatpush1.msra.mxu0 0.0
    %440 = vmatprep.subr.mxu0 0.0
    %441 = vmatpush1.msra.mxu0 0.0
    %442 = vmatprep.subr.mxu0 0.0
    %443 = vmatpush1.msra.mxu0 0.0
    %444 = vmatprep.mubr.f32.mxu0 0.0
    %445 = vmatmul.mubr.f32.gmra.mrb[0].mxu0 %v378
    %v446 = vpop.f32.mrb[0].mxu0
    %v447 = vadd.f32 %v374, %v446
    %v448 = vpop.f32.mrb[0].mxu0
    %449 = vdwg.mxu0
    %450 = vst [vmem:[%s14] sm:$0x3] %v447
    %v451 = vld [vmem:[%s9] sm:$0xff]
    %v452 = vld [vmem:[%s9 + $0x8] sm:$0xff]
    %v453 = vld [vmem:[%s9 + $0x10] sm:$0xff]
    %v454 = vld [vmem:[%s9 + $0x18] sm:$0xff]
    %v455 = vld [vmem:[%s9 + $0x20] sm:$0xff]
    %v456 = vld [vmem:[%s9 + $0x28] sm:$0xff]
    %v457 = vld [vmem:[%s9 + $0x30] sm:$0xff]
    %v458 = vld [vmem:[%s9 + $0x38] sm:$0xff]
    %v459 = vld [vmem:[%s9 + $0x40] sm:$0xff]
    %v460 = vld [vmem:[%s9 + $0x48] sm:$0xff]
    %v461 = vld [vmem:[%s9 + $0x50] sm:$0xff]
    %v462 = vld [vmem:[%s9 + $0x58] sm:$0xff]
    %v463 = vld [vmem:[%s9 + $0x60] sm:$0xff]
    %v464 = vld [vmem:[%s9 + $0x68] sm:$0xff]
    %v465 = vld [vmem:[%s9 + $0x70] sm:$0xff]
    %v466 = vld [vmem:[%s9 + $0x78] sm:$0xff]
    %v467 = vld [vmem:[#allocation6] sm:$0xff]
    %v468 = vld [vmem:[#allocation6 + $0x8] sm:$0xff]
    %v469 = vld [vmem:[#allocation6 + $0x10] sm:$0xff]
    %v470 = vld [vmem:[#allocation6 + $0x18] sm:$0xff]
    %v471 = vld [vmem:[#allocation6 + $0x20] sm:$0xff]
    %v472 = vld [vmem:[#allocation6 + $0x28] sm:$0xff]
    %v473 = vld [vmem:[#allocation6 + $0x30] sm:$0xf]
    %v475 = vsel %vm121, %v473, 0
    %477 = vmatprep.subr.mxu0 0.0
    %478 = vmatpush1.msra.mxu0 %v467
    %479 = vmatprep.subr.mxu0 0.0
    %480 = vmatpush1.msra.mxu0 %v468
    %481 = vmatprep.subr.mxu0 0.0
    %482 = vmatpush1.msra.mxu0 %v469
    %483 = vmatprep.subr.mxu0 0.0
    %484 = vmatpush1.msra.mxu0 %v470
    %485 = vmatprep.subr.mxu0 0.0
    %486 = vmatpush1.msra.mxu0 %v471
    %487 = vmatprep.subr.mxu0 0.0
    %488 = vmatpush1.msra.mxu0 %v472
    %489 = vmatprep.subr.mxu0 0.0
    %490 = vmatpush1.msra.mxu0 %v475
    %491 = vmatprep.subr.mxu0 0.0
    %492 = vmatpush1.msra.mxu0 0.0
    %493 = vmatprep.subr.mxu0 0.0
    %494 = vmatpush1.msra.mxu0 0.0
    %495 = vmatprep.subr.mxu0 0.0
    %496 = vmatpush1.msra.mxu0 0.0
    %497 = vmatprep.subr.mxu0 0.0
    %498 = vmatpush1.msra.mxu0 0.0
    %499 = vmatprep.subr.mxu0 0.0
    %500 = vmatpush1.msra.mxu0 0.0
    %501 = vmatprep.subr.mxu0 0.0
    %502 = vmatpush1.msra.mxu0 0.0
    %503 = vmatprep.subr.mxu0 0.0
    %504 = vmatpush1.msra.mxu0 0.0
    %505 = vmatprep.subr.mxu0 0.0
    %506 = vmatpush1.msra.mxu0 0.0
    %507 = vmatprep.subr.mxu0 0.0
    %508 = vmatpush1.msra.mxu0 0.0
    %509 = vmatprep.subr.mxu0 0.0
    %510 = vmatpush1.msra.mxu0 0.0
    %511 = vmatprep.subr.mxu0 0.0
    %512 = vmatpush1.msra.mxu0 0.0
    %513 = vmatprep.subr.mxu0 0.0
    %514 = vmatpush1.msra.mxu0 0.0
    %515 = vmatprep.subr.mxu0 0.0
    %516 = vmatpush1.msra.mxu0 0.0
    %517 = vmatprep.subr.mxu0 0.0
    %518 = vmatpush1.msra.mxu0 0.0
    %519 = vmatprep.subr.mxu0 0.0
    %520 = vmatpush1.msra.mxu0 0.0
    %521 = vmatprep.subr.mxu0 0.0
    %522 = vmatpush1.msra.mxu0 0.0
    %523 = vmatprep.subr.mxu0 0.0
    %524 = vmatpush1.msra.mxu0 0.0
    %525 = vmatprep.subr.mxu0 0.0
    %526 = vmatpush1.msra.mxu0 0.0
    %527 = vmatprep.subr.mxu0 0.0
    %528 = vmatpush1.msra.mxu0 0.0
    %529 = vmatprep.subr.mxu0 0.0
    %530 = vmatpush1.msra.mxu0 0.0
    %531 = vmatprep.subr.mxu0 0.0
    %532 = vmatpush1.msra.mxu0 0.0
    %533 = vmatprep.subr.mxu0 0.0
    %534 = vmatpush1.msra.mxu0 0.0
    %535 = vmatprep.subr.mxu0 0.0
    %536 = vmatpush1.msra.mxu0 0.0
    %537 = vmatprep.subr.mxu0 0.0
    %538 = vmatpush1.msra.mxu0 0.0
    %539 = vmatprep.subr.mxu0 0.0
    %540 = vmatpush1.msra.mxu0 0.0
    %541 = vmatprep.mubr.f32.mxu0 0.0
    %542 = vmatmul.mubr.f32.gmra.mrb[0].mxu0 %v119
    %v543 = vpop.f32.mrb[0].mxu0
    %v544 = vadd.f32 0.0, %v543
    %v545 = vpop.f32.mrb[0].mxu0
    %546 = vdwg.mxu0
    %547 = vmatprep.subr.mxu0 0.0
    %548 = vmatpush1.msra.mxu0 %v451
    %549 = vmatprep.subr.mxu0 0.0
    %550 = vmatpush1.msra.mxu0 %v452
    %551 = vmatprep.subr.mxu0 0.0
    %552 = vmatpush1.msra.mxu0 %v453
    %553 = vmatprep.subr.mxu0 0.0
    %554 = vmatpush1.msra.mxu0 %v454
    %555 = vmatprep.subr.mxu0 0.0
    %556 = vmatpush1.msra.mxu0 %v455
    %557 = vmatprep.subr.mxu0 0.0
    %558 = vmatpush1.msra.mxu0 %v456
    %559 = vmatprep.subr.mxu0 0.0
    %560 = vmatpush1.msra.mxu0 %v457
    %561 = vmatprep.subr.mxu0 0.0
    %562 = vmatpush1.msra.mxu0 %v458
    %563 = vmatprep.subr.mxu0 0.0
    %564 = vmatpush1.msra.mxu0 %v459
    %565 = vmatprep.subr.mxu0 0.0
    %566 = vmatpush1.msra.mxu0 %v460
    %567 = vmatprep.subr.mxu0 0.0
    %568 = vmatpush1.msra.mxu0 %v461
    %569 = vmatprep.subr.mxu0 0.0
    %570 = vmatpush1.msra.mxu0 %v462
    %571 = vmatprep.subr.mxu0 0.0
    %572 = vmatpush1.msra.mxu0 %v463
    %573 = vmatprep.subr.mxu0 0.0
    %574 = vmatpush1.msra.mxu0 %v464
    %575 = vmatprep.subr.mxu0 0.0
    %576 = vmatpush1.msra.mxu0 %v465
    %577 = vmatprep.subr.mxu0 0.0
    %578 = vmatpush1.msra.mxu0 %v466
    %579 = vmatprep.subr.mxu0 0.0
    %580 = vmatpush1.msra.mxu0 0.0
    %581 = vmatprep.subr.mxu0 0.0
    %582 = vmatpush1.msra.mxu0 0.0
    %583 = vmatprep.subr.mxu0 0.0
    %584 = vmatpush1.msra.mxu0 0.0
    %585 = vmatprep.subr.mxu0 0.0
    %586 = vmatpush1.msra.mxu0 0.0
    %587 = vmatprep.subr.mxu0 0.0
    %588 = vmatpush1.msra.mxu0 0.0
    %589 = vmatprep.subr.mxu0 0.0
    %590 = vmatpush1.msra.mxu0 0.0
    %591 = vmatprep.subr.mxu0 0.0
    %592 = vmatpush1.msra.mxu0 0.0
    %593 = vmatprep.subr.mxu0 0.0
    %594 = vmatpush1.msra.mxu0 0.0
    %595 = vmatprep.subr.mxu0 0.0
    %596 = vmatpush1.msra.mxu0 0.0
    %597 = vmatprep.subr.mxu0 0.0
    %598 = vmatpush1.msra.mxu0 0.0
    %599 = vmatprep.subr.mxu0 0.0
    %600 = vmatpush1.msra.mxu0 0.0
    %601 = vmatprep.subr.mxu0 0.0
    %602 = vmatpush1.msra.mxu0 0.0
    %603 = vmatprep.subr.mxu0 0.0
    %604 = vmatpush1.msra.mxu0 0.0
    %605 = vmatprep.subr.mxu0 0.0
    %606 = vmatpush1.msra.mxu0 0.0
    %607 = vmatprep.subr.mxu0 0.0
    %608 = vmatpush1.msra.mxu0 0.0
    %609 = vmatprep.subr.mxu0 0.0
    %610 = vmatpush1.msra.mxu0 0.0
    %611 = vmatprep.mubr.f32.mxu0 0.0
    %612 = vmatmul.mubr.f32.gmra.mrb[0].mxu0 %v447
    %v613 = vpop.f32.mrb[0].mxu0
    %v614 = vadd.f32 %v544, %v613
    %v615 = vpop.f32.mrb[0].mxu0
    %616 = vdwg.mxu0
    %v617 = vld [vmem:[#allocation7] sm:$0x1]
    %v619 = vlaneseq
    %v620 = vshrl.u32 %v619, 7
    %v621 = vsub.s32 0, %v620
    %v622 = vrot.slane %v617, %v621
    %v624 = vadd.f32 %v614, %v622
    %v625 = vmax.f32 %v624, 0.0
    %v626 = vld [vmem:[%s12] sm:$0xff]
    %v627 = vld [vmem:[%s12 + $0x8] sm:$0xff]
    %v628 = vld [vmem:[%s12 + $0x10] sm:$0xff]
    %v629 = vld [vmem:[%s12 + $0x18] sm:$0xff]
    %v630 = vld [vmem:[%s12 + $0x20] sm:$0xff]
    %v631 = vld [vmem:[%s12 + $0x28] sm:$0xff]
    %v632 = vld [vmem:[%s12 + $0x30] sm:$0xff]
    %v633 = vld [vmem:[%s12 + $0x38] sm:$0xff]
    %v634 = vld [vmem:[%s12 + $0x40] sm:$0xff]
    %v635 = vld [vmem:[%s12 + $0x48] sm:$0xff]
    %v636 = vld [vmem:[%s12 + $0x50] sm:$0xff]
    %v637 = vld [vmem:[%s12 + $0x58] sm:$0xff]
    %v638 = vld [vmem:[%s12 + $0x60] sm:$0xff]
    %v639 = vld [vmem:[%s12 + $0x68] sm:$0xff]
    %v640 = vld [vmem:[%s12 + $0x70] sm:$0xff]
    %v641 = vld [vmem:[%s12 + $0x78] sm:$0xff]
    %v642 = vld [vmem:[%s12 + $0x80] sm:$0xff]
    %v643 = vld [vmem:[%s12 + $0x88] sm:$0xff]
    %v644 = vld [vmem:[%s12 + $0x90] sm:$0xff]
    %v645 = vld [vmem:[%s12 + $0x98] sm:$0xff]
    %v646 = vld [vmem:[%s12 + $0xa0] sm:$0xff]
    %v647 = vld [vmem:[%s12 + $0xa8] sm:$0xff]
    %v648 = vld [vmem:[%s12 + $0xb0] sm:$0xff]
    %v649 = vld [vmem:[%s12 + $0xb8] sm:$0xff]
    %v650 = vld [vmem:[%s12 + $0xc0] sm:$0xff]
    %v651 = vld [vmem:[%s12 + $0xc8] sm:$0xff]
    %v652 = vld [vmem:[%s12 + $0xd0] sm:$0xff]
    %v653 = vld [vmem:[%s12 + $0xd8] sm:$0xff]
    %v654 = vld [vmem:[%s12 + $0xe0] sm:$0xff]
    %v655 = vld [vmem:[%s12 + $0xe8] sm:$0xff]
    %v656 = vld [vmem:[%s12 + $0xf0] sm:$0xff]
    %v657 = vld [vmem:[%s12 + $0xf8] sm:$0xff]
    %v658 = vld [vmem:[%s12 + $0x100] sm:$0xff]
    %v659 = vld [vmem:[%s12 + $0x108] sm:$0xff]
    %v660 = vld [vmem:[%s12 + $0x110] sm:$0xff]
    %v661 = vld [vmem:[%s12 + $0x118] sm:$0xff]
    %v662 = vld [vmem:[%s12 + $0x120] sm:$0xff]
    %v663 = vld [vmem:[%s12 + $0x128] sm:$0xff]
    %v664 = vld [vmem:[%s12 + $0x130] sm:$0xff]
    %v665 = vld [vmem:[%s12 + $0x138] sm:$0xff]
    %v666 = vld [vmem:[%s13] sm:$0x1f]
    %v668 = vlaneseq
    %v669 = vshrl.u32 %v668, 7
    %v670 = vsub.s32 0, %v669
    %v671 = vrot.slane %v666, %v670
    %v672 = vlaneseq
    %v673 = vshrl.u32 %v672, 7
    %v674 = vsub.s32 1, %v673
    %v675 = vrot.slane %v666, %v674
    %v676 = vlaneseq
    %v677 = vshrl.u32 %v676, 7
    %v678 = vsub.s32 2, %v677
    %v679 = vrot.slane %v666, %v678
    %v680 = vlaneseq
    %v681 = vshrl.u32 %v680, 7
    %v682 = vsub.s32 3, %v681
    %v683 = vrot.slane %v666, %v682
    %v684 = vlaneseq
    %v685 = vshrl.u32 %v684, 7
    %v686 = vsub.s32 4, %v685
    %v687 = vrot.slane %v666, %v686
    %v694 = vsel %vm376, %v625, 0
    %696 = vmatprep.subr.mxu0 %v627
    %697 = vmatpush1.msra.mxu0 %v626
    %698 = vmatprep.subr.mxu0 %v632
    %699 = vmatpush1.msra.mxu0 %v631
    %700 = vmatprep.subr.mxu0 %v637
    %701 = vmatpush1.msra.mxu0 %v636
    %702 = vmatprep.subr.mxu0 %v642
    %703 = vmatpush1.msra.mxu0 %v641
    %704 = vmatprep.subr.mxu0 %v647
    %705 = vmatpush1.msra.mxu0 %v646
    %706 = vmatprep.subr.mxu0 %v652
    %707 = vmatpush1.msra.mxu0 %v651
    %708 = vmatprep.subr.mxu0 %v657
    %709 = vmatpush1.msra.mxu0 %v656
    %710 = vmatprep.subr.mxu0 %v662
    %711 = vmatpush1.msra.mxu0 %v661
    %712 = vmatprep.subr.mxu0 0.0
    %713 = vmatpush1.msra.mxu0 0.0
    %714 = vmatprep.subr.mxu0 0.0
    %715 = vmatpush1.msra.mxu0 0.0
    %716 = vmatprep.subr.mxu0 0.0
    %717 = vmatpush1.msra.mxu0 0.0
    %718 = vmatprep.subr.mxu0 0.0
    %719 = vmatpush1.msra.mxu0 0.0
    %720 = vmatprep.subr.mxu0 0.0
    %721 = vmatpush1.msra.mxu0 0.0
    %722 = vmatprep.subr.mxu0 0.0
    %723 = vmatpush1.msra.mxu0 0.0
    %724 = vmatprep.subr.mxu0 0.0
    %725 = vmatpush1.msra.mxu0 0.0
    %726 = vmatprep.subr.mxu0 0.0
    %727 = vmatpush1.msra.mxu0 0.0
    %728 = vmatprep.subr.mxu0 0.0
    %729 = vmatpush1.msra.mxu0 0.0
    %730 = vmatprep.subr.mxu0 0.0
    %731 = vmatpush1.msra.mxu0 0.0
    %732 = vmatprep.subr.mxu0 0.0
    %733 = vmatpush1.msra.mxu0 0.0
    %734 = vmatprep.subr.mxu0 0.0
    %735 = vmatpush1.msra.mxu0 0.0
    %736 = vmatprep.subr.mxu0 0.0
    %737 = vmatpush1.msra.mxu0 0.0
    %738 = vmatprep.subr.mxu0 0.0
    %739 = vmatpush1.msra.mxu0 0.0
    %740 = vmatprep.subr.mxu0 0.0
    %741 = vmatpush1.msra.mxu0 0.0
    %742 = vmatprep.subr.mxu0 0.0
    %743 = vmatpush1.msra.mxu0 0.0
    %744 = vmatprep.subr.mxu0 0.0
    %745 = vmatpush1.msra.mxu0 0.0
    %746 = vmatprep.subr.mxu0 0.0
    %747 = vmatpush1.msra.mxu0 0.0
    %748 = vmatprep.subr.mxu0 0.0
    %749 = vmatpush1.msra.mxu0 0.0
    %750 = vmatprep.subr.mxu0 0.0
    %751 = vmatpush1.msra.mxu0 0.0
    %752 = vmatprep.subr.mxu0 0.0
    %753 = vmatpush1.msra.mxu0 0.0
    %754 = vmatprep.subr.mxu0 0.0
    %755 = vmatpush1.msra.mxu0 0.0
    %756 = vmatprep.subr.mxu0 0.0
    %757 = vmatpush1.msra.mxu0 0.0
    %758 = vmatprep.subr.mxu0 0.0
    %759 = vmatpush1.msra.mxu0 0.0
    %760 = vmatprep.mubr.f32.mxu0 0.0
    %761 = vmatmul.mubr.f32.gmra.mrb[0].mxu0 %v694
    %v762 = vpop.f32.mrb[0].mxu0
    %v763 = vadd.f32 %v671, %v762
    %v764 = vpop.f32.mrb[0].mxu0
    %v765 = vadd.f32 %v675, %v764
    %766 = vdwg.mxu0
    %767 = vmatprep.subr.mxu0 %v629
    %768 = vmatpush1.msra.mxu0 %v628
    %769 = vmatprep.subr.mxu0 %v634
    %770 = vmatpush1.msra.mxu0 %v633
    %771 = vmatprep.subr.mxu0 %v639
    %772 = vmatpush1.msra.mxu0 %v638
    %773 = vmatprep.subr.mxu0 %v644
    %774 = vmatpush1.msra.mxu0 %v643
    %775 = vmatprep.subr.mxu0 %v649
    %776 = vmatpush1.msra.mxu0 %v648
    %777 = vmatprep.subr.mxu0 %v654
    %778 = vmatpush1.msra.mxu0 %v653
    %779 = vmatprep.subr.mxu0 %v659
    %780 = vmatpush1.msra.mxu0 %v658
    %781 = vmatprep.subr.mxu0 %v664
    %782 = vmatpush1.msra.mxu0 %v663
    %783 = vmatprep.subr.mxu0 0.0
    %784 = vmatpush1.msra.mxu0 0.0
    %785 = vmatprep.subr.mxu0 0.0
    %786 = vmatpush1.msra.mxu0 0.0
    %787 = vmatprep.subr.mxu0 0.0
    %788 = vmatpush1.msra.mxu0 0.0
    %789 = vmatprep.subr.mxu0 0.0
    %790 = vmatpush1.msra.mxu0 0.0
    %791 = vmatprep.subr.mxu0 0.0
    %792 = vmatpush1.msra.mxu0 0.0
    %793 = vmatprep.subr.mxu0 0.0
    %794 = vmatpush1.msra.mxu0 0.0
    %795 = vmatprep.subr.mxu0 0.0
    %796 = vmatpush1.msra.mxu0 0.0
    %797 = vmatprep.subr.mxu0 0.0
    %798 = vmatpush1.msra.mxu0 0.0
    %799 = vmatprep.subr.mxu0 0.0
    %800 = vmatpush1.msra.mxu0 0.0
    %801 = vmatprep.subr.mxu0 0.0
    %802 = vmatpush1.msra.mxu0 0.0
    %803 = vmatprep.subr.mxu0 0.0
    %804 = vmatpush1.msra.mxu0 0.0
    %805 = vmatprep.subr.mxu0 0.0
    %806 = vmatpush1.msra.mxu0 0.0
    %807 = vmatprep.subr.mxu0 0.0
    %808 = vmatpush1.msra.mxu0 0.0
    %809 = vmatprep.subr.mxu0 0.0
    %810 = vmatpush1.msra.mxu0 0.0
    %811 = vmatprep.subr.mxu0 0.0
    %812 = vmatpush1.msra.mxu0 0.0
    %813 = vmatprep.subr.mxu0 0.0
    %814 = vmatpush1.msra.mxu0 0.0
    %815 = vmatprep.subr.mxu0 0.0
    %816 = vmatpush1.msra.mxu0 0.0
    %817 = vmatprep.subr.mxu0 0.0
    %818 = vmatpush1.msra.mxu0 0.0
    %819 = vmatprep.subr.mxu0 0.0
    %820 = vmatpush1.msra.mxu0 0.0
    %821 = vmatprep.subr.mxu0 0.0
    %822 = vmatpush1.msra.mxu0 0.0
    %823 = vmatprep.subr.mxu0 0.0
    %824 = vmatpush1.msra.mxu0 0.0
    %825 = vmatprep.subr.mxu0 0.0
    %826 = vmatpush1.msra.mxu0 0.0
    %827 = vmatprep.subr.mxu0 0.0
    %828 = vmatpush1.msra.mxu0 0.0
    %829 = vmatprep.subr.mxu0 0.0
    %830 = vmatpush1.msra.mxu0 0.0
    %831 = vmatprep.mubr.f32.mxu0 0.0
    %832 = vmatmul.mubr.f32.gmra.mrb[0].mxu0 %v694
    %v833 = vpop.f32.mrb[0].mxu0
    %v834 = vadd.f32 %v679, %v833
    %v835 = vpop.f32.mrb[0].mxu0
    %v836 = vadd.f32 %v683, %v835
    %837 = vdwg.mxu0
    %838 = vmatprep.subr.mxu0 0.0
    %839 = vmatpush1.msra.mxu0 %v630
    %840 = vmatprep.subr.mxu0 0.0
    %841 = vmatpush1.msra.mxu0 %v635
    %842 = vmatprep.subr.mxu0 0.0
    %843 = vmatpush1.msra.mxu0 %v640
    %844 = vmatprep.subr.mxu0 0.0
    %845 = vmatpush1.msra.mxu0 %v645
    %846 = vmatprep.subr.mxu0 0.0
    %847 = vmatpush1.msra.mxu0 %v650
    %848 = vmatprep.subr.mxu0 0.0
    %849 = vmatpush1.msra.mxu0 %v655
    %850 = vmatprep.subr.mxu0 0.0
    %851 = vmatpush1.msra.mxu0 %v660
    %852 = vmatprep.subr.mxu0 0.0
    %853 = vmatpush1.msra.mxu0 %v665
    %854 = vmatprep.subr.mxu0 0.0
    %855 = vmatpush1.msra.mxu0 0.0
    %856 = vmatprep.subr.mxu0 0.0
    %857 = vmatpush1.msra.mxu0 0.0
    %858 = vmatprep.subr.mxu0 0.0
    %859 = vmatpush1.msra.mxu0 0.0
    %860 = vmatprep.subr.mxu0 0.0
    %861 = vmatpush1.msra.mxu0 0.0
    %862 = vmatprep.subr.mxu0 0.0
    %863 = vmatpush1.msra.mxu0 0.0
    %864 = vmatprep.subr.mxu0 0.0
    %865 = vmatpush1.msra.mxu0 0.0
    %866 = vmatprep.subr.mxu0 0.0
    %867 = vmatpush1.msra.mxu0 0.0
    %868 = vmatprep.subr.mxu0 0.0
    %869 = vmatpush1.msra.mxu0 0.0
    %870 = vmatprep.subr.mxu0 0.0
    %871 = vmatpush1.msra.mxu0 0.0
    %872 = vmatprep.subr.mxu0 0.0
    %873 = vmatpush1.msra.mxu0 0.0
    %874 = vmatprep.subr.mxu0 0.0
    %875 = vmatpush1.msra.mxu0 0.0
    %876 = vmatprep.subr.mxu0 0.0
    %877 = vmatpush1.msra.mxu0 0.0
    %878 = vmatprep.subr.mxu0 0.0
    %879 = vmatpush1.msra.mxu0 0.0
    %880 = vmatprep.subr.mxu0 0.0
    %881 = vmatpush1.msra.mxu0 0.0
    %882 = vmatprep.subr.mxu0 0.0
    %883 = vmatpush1.msra.mxu0 0.0
    %884 = vmatprep.subr.mxu0 0.0
    %885 = vmatpush1.msra.mxu0 0.0
    %886 = vmatprep.subr.mxu0 0.0
    %887 = vmatpush1.msra.mxu0 0.0
    %888 = vmatprep.subr.mxu0 0.0
    %889 = vmatpush1.msra.mxu0 0.0
    %890 = vmatprep.subr.mxu0 0.0
    %891 = vmatpush1.msra.mxu0 0.0
    %892 = vmatprep.subr.mxu0 0.0
    %893 = vmatpush1.msra.mxu0 0.0
    %894 = vmatprep.subr.mxu0 0.0
    %895 = vmatpush1.msra.mxu0 0.0
    %896 = vmatprep.subr.mxu0 0.0
    %897 = vmatpush1.msra.mxu0 0.0
    %898 = vmatprep.subr.mxu0 0.0
    %899 = vmatpush1.msra.mxu0 0.0
    %900 = vmatprep.subr.mxu0 0.0
    %901 = vmatpush1.msra.mxu0 0.0
    %902 = vmatprep.mubr.f32.mxu0 0.0
    %903 = vmatmul.mubr.f32.gmra.mrb[0].mxu0 %v694
    %v904 = vpop.f32.mrb[0].mxu0
    %v905 = vadd.f32 %v687, %v904
    %v906 = vpop.f32.mrb[0].mxu0
    %907 = vdwg.mxu0
    %v913 = vcombine.low %v763, %v765
    %v914 = vcombine.low %v834, %v836
    %v916 = vunpack.c.l.s4 1983009808
    %v917 = vunpack.c.0.s8 %v916
    %v918 = vlaneseq
    %v919 = vshrl.u32 %v918, 7
    %v920 = vsub.s32 %v917, %v919
    %v921 = vrot.slane %v913, %v920
    %v923 = vunpack.c.l.s4 1983009808
    %v924 = vunpack.c.0.s8 %v923
    %v925 = vlaneseq
    %v926 = vshrl.u32 %v925, 7
    %v927 = vsub.s32 %v924, %v926
    %v928 = vrot.slane %v914, %v927
    %v929 = vcombine.low %v921, %v928
    %v931 = vunpack.c.l.s4 1983009808
    %v932 = vunpack.c.0.s8 %v931
    %v933 = vlaneseq
    %v934 = vshrl.u32 %v933, 7
    %v935 = vsub.s32 %v932, %v934
    %v936 = vrot.slane %v905, %v935
    %939 = vst [vmem:[%s15] sm:$0xff] %v929
    %940 = vst [vmem:[%s15 + $0x8] sm:$0x3] %v936
    // Predicated region
    $region74: #{diff_ab_keypoint_forward.1} parent=1 // pred_check
      _
    $region75: #{diff_ab_keypoint_forward.1} parent=1 // pred_check_branch
      %942 = sbr.rel (0) target = $region77
    $region76: #{diff_ab_keypoint_forward.1} parent=1 // pred_region
      _
    $region77: #{diff_ab_keypoint_forward.1} parent=1 // pred_fallthru
      _
    // Predicated region
    $region78: #{diff_ab_keypoint_forward.1} parent=1 // pred_check
      _
    $region79: #{diff_ab_keypoint_forward.1} parent=1 // pred_check_branch
      %944 = sbr.rel (0) target = $region81
    $region80: #{diff_ab_keypoint_forward.1} parent=1 // pred_region
      _
    $region81: #{diff_ab_keypoint_forward.1} parent=1 // pred_fallthru
      _
    // Predicated region
    $region82: #{diff_ab_keypoint_forward.1} parent=1 // pred_check
      _
    $region83: #{diff_ab_keypoint_forward.1} parent=1 // pred_check_branch
      %946 = sbr.rel (0) target = $region85
    $region84: #{diff_ab_keypoint_forward.1} parent=1 // pred_region
      _
    $region85: #{diff_ab_keypoint_forward.1} parent=1 // pred_fallthru
      _
    // Predicated region
    $region86: #{diff_ab_keypoint_forward.1} parent=1 // pred_check
      _
    $region87: #{diff_ab_keypoint_forward.1} parent=1 // pred_check_branch
      %948 = sbr.rel (0) target = $region89
    $region88: #{diff_ab_keypoint_forward.1} parent=1 // pred_region
      _
    $region89: #{diff_ab_keypoint_forward.1} parent=1 // pred_fallthru
      _
    %949 = vsyncpa [#allocation3], 1
    %950 = vsyncpa [#allocation5], 1
    %951 = vsyncpa [#allocation8], 1

</llo_original>
